<compile_context>
chip_gen: v7x
topology: tpu7x:2x2x1
jax: 0.10.0
libtpu: 0.0.40
codegen_flags: <defaults>
</compile_context>

<pallas_src>
import jax
import jax.numpy as jnp
from jax.experimental import pallas as pl
from jax.experimental.pallas import tpu as pltpu

_LANES = 128
_TARGET_BLOCK_BYTES = 4 << 20  # ~4 MiB blocks: near HBM roofline on v5e/v6e/v7x


def _native_sublanes(dtype) -> int:
    """Native sublane packing: 8 for 4-byte, 16 for 2-byte, 32 for 1-byte."""
    itemsize = jnp.dtype(dtype).itemsize
    return max(8, 32 // itemsize)


def _scale_kernel(scale_ref, x_ref, o_ref):
    # scale_ref: (1,) f32 scalar-prefetch in SMEM; x_ref/o_ref: (BLOCK_ROWS, 128).
    # Cast the scalar (not the tile) so the multiply runs at the input dtype's
    # native vreg width (bf16 stays packed on v6e/v7x).
    o_ref[...] = x_ref[...] * scale_ref[0].astype(x_ref.dtype)


def _scale_pallas_2d(x2d, scale_f32, *, donate_x=False):
    rows, lanes = x2d.shape
    dtype = x2d.dtype
    itemsize = jnp.dtype(dtype).itemsize
    native = _native_sublanes(dtype)

    # ~4 MiB block, rounded to the dtype's native sublane tile; never bigger
    # than the (native-rounded) array so single-block cases stay legal.
    target_rows = max(native, _TARGET_BLOCK_BYTES // (lanes * itemsize))
    target_rows = (target_rows // native) * native
    rows_rounded = ((rows + native - 1) // native) * native
    block_rows = min(target_rows, rows_rounded)

    # v7x megacore: ensure the "parallel" axis has >= 2 grid steps whenever the
    # slab spans more than one native tile, so both TensorCores get work.
    if pl.cdiv(rows, block_rows) < 2 and rows_rounded >= 2 * native:
        half_rows = ((rows_rounded // 2 + native - 1) // native) * native
        block_rows = min(block_rows, half_rows)

    grid = (pl.cdiv(rows, block_rows),)

    return pl.pallas_call(
        _scale_kernel,
        out_shape=jax.ShapeDtypeStruct((rows, lanes), dtype),
        grid_spec=pltpu.PrefetchScalarGridSpec(
            num_scalar_prefetch=1,
            grid=grid,
            # index_maps receive the scalar-prefetch ref as a trailing arg.
            in_specs=[pl.BlockSpec((block_rows, lanes), lambda i, s: (i, 0))],
            out_specs=pl.BlockSpec((block_rows, lanes), lambda i, s: (i, 0)),
        ),
        compiler_params=pltpu.CompilerParams(
            dimension_semantics=("parallel",),
            vmem_limit_bytes=32 * 1024 * 1024,
        ),
        # Elementwise: block i is read before it is written, so aliasing is safe.
        input_output_aliases=({1: 0} if donate_x else {}),
    )(scale_f32, x2d)


def scale_forward(x, scale, *, min_pallas_bytes=256 * 1024, donate_x=False):
    """y = x * scale, elementwise.  x: any shape (e.g. NCHW); scale: scalar."""
    orig_shape = x.shape
    orig_dtype = x.dtype
    n = x.size
    nbytes = n * jnp.dtype(orig_dtype).itemsize
    scale_f32 = jnp.asarray(scale, dtype=jnp.float32)

    # Small / empty / non-128-multiple / non-float tensors: let XLA's fused
    # multiply handle it (no pad pass, no Pallas launch overhead, and integer
    # rounding semantics stay with XLA).
    is_float = jnp.issubdtype(orig_dtype, jnp.floating)
    if n == 0 or (n % _LANES) != 0 or nbytes < min_pallas_bytes or not is_float:
        return (x * scale_f32).astype(orig_dtype)

    # For default (contiguous) layouts this reshape is a free bitcast; the last
    # dim maps straight onto the 128-wide lane axis.
    x2d = x.reshape(n // _LANES, _LANES)
    scale_arr = scale_f32.reshape(1)
    out2d = _scale_pallas_2d(x2d, scale_arr, donate_x=donate_x)
    return out2d.reshape(orig_shape)


if __name__ == "__main__":
    key = jax.random.PRNGKey(0)
    # NCHW input, small shape (2*4*16*16 = 2048 elements, divisible by 128).
    x = jax.random.normal(key, (2, 4, 16, 16), dtype=jnp.float32)

    # Deterministic parameter init (matches nn.Parameter(torch.tensor(scale))).
    scale_init = 0.5

    # Force the Pallas path for this small test tensor (exercises the 2-step
    # grid split: 16 rows -> two (8, 128) blocks).
    y = jax.block_until_ready(scale_forward(x, scale_init, min_pallas_bytes=0))
    ref = x * jnp.float32(scale_init)
    assert y.shape == x.shape and y.dtype == x.dtype
    assert jnp.allclose(y, ref, atol=1e-6, rtol=1e-6)

    # Default wrapper path (small input -> XLA fallback) must also match.
    y2 = jax.block_until_ready(scale_forward(x, scale_init))
    assert jnp.allclose(y2, ref, atol=1e-6, rtol=1e-6)

    # bf16 path: native-dtype multiply inside the kernel (scale 0.5 is exact).
    x_bf16 = x.astype(jnp.bfloat16)
    y3 = jax.block_until_ready(scale_forward(x_bf16, scale_init, min_pallas_bytes=0))
    ref_bf16 = x_bf16 * jnp.asarray(scale_init, dtype=jnp.bfloat16)
    assert y3.dtype == jnp.bfloat16
    assert jnp.allclose(y3.astype(jnp.float32), ref_bf16.astype(jnp.float32),
                        atol=1e-2, rtol=1e-2)

    print("KERNEL_OK")
</pallas_src>

<mosaic_0001>
module attributes {stable_mosaic.version = 11 : i64} {
  func.func @_scale_kernel(%arg0: i32, %arg1: memref<1xf32, #tpu.memory_space<smem>>, %arg2: memref<8x128xf32, #tpu.memory_space<vmem>>, %arg3: memref<8x128xf32, #tpu.memory_space<vmem>>) attributes {dimension_semantics = [#tpu.dimension_semantics<parallel>], iteration_bounds = array<i64: 2>, scalar_prefetch = 1 : i64, scratch_operands = 0 : i64, tpu.core_type = #tpu.core_type<tc>, window_params = [{transform_indices = @transform_0, window_bounds = array<i64: 8, 128>}, {transform_indices = @transform_1, window_bounds = array<i64: 8, 128>}]} {
    %c0 = arith.constant 0 : index
    %c0_0 = arith.constant 0 : index
    %0 = vector.load %arg2[%c0, %c0_0] : memref<8x128xf32, #tpu.memory_space<vmem>>, vector<8x128xf32>
    %c0_1 = arith.constant 0 : index
    %1 = memref.load %arg1[%c0_1] : memref<1xf32, #tpu.memory_space<smem>>
    %2 = vector.broadcast %1 : f32 to vector<8x128xf32>
    %3 = arith.mulf %0, %2 : vector<8x128xf32>
    %c0_2 = arith.constant 0 : index
    %c0_3 = arith.constant 0 : index
    %4 = vector.load %arg3[%c0_2, %c0_3] : memref<8x128xf32, #tpu.memory_space<vmem>>, vector<8x128xf32>
    tpu.vector_store %arg3[%c0_2, %c0_3], %3 {strides = array<i32>} : memref<8x128xf32, #tpu.memory_space<vmem>>, vector<8x128xf32>,
    return
  }
  func.func @transform_0(%arg0: i32, %arg1: memref<1xf32, #tpu.memory_space<smem>>) -> (i32, i32) {
    %c0_i32 = arith.constant 0 : i32
    %c0_i32_0 = arith.constant 0 : i32
    return %arg0, %c0_i32 : i32, i32
  }
  func.func @transform_1(%arg0: i32, %arg1: memref<1xf32, #tpu.memory_space<smem>>) -> (i32, i32) {
    %c0_i32 = arith.constant 0 : i32
    %c0_i32_0 = arith.constant 0 : i32
    return %arg0, %c0_i32 : i32, i32
  }
}

</mosaic_0001>

<llo_original>
// kernel: tpu_custom_call.1
$region0: #{tpu_custom_call.1}
  #allocation0 [shape = 'u32[]', space=smem, size = 0x4, offset = 0x4, fixed_abs, tag = 'smem constant byte address 0x4 - core index']
  #allocation1 [shape = 'u32[144,128]{1,0:T(1,128)}', space=vmem, size = 0x12000, scoped, tag = 'internal scratch']
  #allocation2 [shape = 's32[1]{0}', space=sflag, size = 0x4, scoped, tag = 'scoped memory for tpu_custom_call.1']
  #allocation3 [shape = 'f32[1]{0:T(128)S(6)}', space=smem, size = 0x200, scoped, tag = 'prefetched SMEM operand 0']
  %s0 = inlined_call_operand.<no memory space> [shape: f32[1], index: 0, kind: input, shape index: {}]
  %s1 = inlined_call_operand.hbm [shape: f32[16,128], index: 1, kind: input, shape index: {}]
  %s2 = inlined_call_operand.hbm [shape: f32[16,128], index: 2, kind: output, shape index: {}]
  %s3 = sld [smem:[#allocation0]]
  $region41: #{tpu_custom_call.1} parent=0
    _
  %s5 = ssub.s32 1, %s3
  %s6 = scalar_select 0, %s5, %s3
  %7 = sst [smem:[#allocation3]] %s0
  $region1: #{tpu_custom_call.1} parent=0
    #allocation4 [shape = 'u8[8192]{0}', space=vmem, size = 0x2000, scoped, tag = 'input window, operand 1']
    #allocation5 [shape = 's32[2]{0}', space=sflag, size = 0x8, scoped, tag = 'scoped memory for tpu_custom_call.1']
    #allocation6 [shape = 's32[2]{0}', space=sflag, size = 0x8, scoped, tag = 'scoped memory for tpu_custom_call.1']
    #allocation7 [shape = 'u8[8192]{0}', space=vmem, size = 0x2000, scoped, tag = 'output window, operand 0']
    %8 = vsyncpa [#allocation5], 0
    %s9 = scalar_lea.sflag [#allocation5], 1
    %10 = vsyncpa %s9, 0
    %11 = vsyncpa [#allocation6], 0
    %s12 = scalar_lea.sflag [#allocation6], 1
    %13 = vsyncpa %s12, 0
    loop: start=0, step=1, limit=4
    $region2: #{tpu_custom_call.1} parent=1 // loop_pre_header
      _
    $region3: #{tpu_custom_call.1} parent=1 // loop_header
      %s15 = sphi 0, %s19
      %p16 = scmp.ge.s32.totalorder %s15, 4
      %s25 = sphi 0, %s27
      %s28 = sphi 0, %s25
      %s29 = sphi 0, %s28
      %s45 = sphi 0, %s29
      %s51 = sphi 0, %s53
      %s54 = sphi 0, %s51
      %s55 = sphi 0, %s54
      %s71 = sphi 0, %s55
    $region4: #{tpu_custom_call.1} parent=1 // loop_header_branch
      %18 = sbr.rel (%p16) target = $region8
    $region5: #{tpu_custom_call.1} parent=1 // loop_body
      %s20 = ssub.s32 %s15, 1
      %s21 = ssub.s32 %s15, 2
      %s22 = sadd.s32 %s15, 1
      %s23 = ssub.s32 %s15, %s22
      %p24 = scmp.eq.s32.totalorder %s23, 0
      %s26 = sadd.s32 %s25, 1
      %s27 = scalar_select %p24, %s25, %s26
      %p30 = pneg %p24
      %p31 = scmp.eq.s32.totalorder %s15, 1
      %p32 = por %p30, %p31
      %p33 = scmp.ne.s32.totalorder %s25, %s28
      %p34 = scmp.eq.s32.totalorder %s15, 0
      %p35 = por %p33, %p34
      %p36 = scmp.ne.s32.totalorder %s25, %s28
      %p37 = scmp.eq.s32.totalorder %s20, 1
      %p38 = por %p36, %p37
      %p39 = scmp.ne.s32.totalorder %s28, %s29
      %p40 = scmp.eq.s32.totalorder %s20, 0
      %p41 = por %p39, %p40
      %p42 = scmp.ne.s32.totalorder %s28, %s29
      %p43 = scmp.eq.s32.totalorder %s21, 1
      %p44 = por %p42, %p43
      %p46 = scmp.ne.s32.totalorder %s29, %s45
      %p47 = scmp.eq.s32.totalorder %s21, 0
      %p48 = por %p46, %p47
      %s49 = ssub.s32 %s15, %s22
      %p50 = scmp.eq.s32.totalorder %s49, 0
      %s52 = sadd.s32 %s51, 1
      %s53 = scalar_select %p50, %s51, %s52
      %p56 = pneg %p50
      %p57 = scmp.eq.s32.totalorder %s15, 1
      %p58 = por %p56, %p57
      %p59 = scmp.ne.s32.totalorder %s51, %s54
      %p60 = scmp.eq.s32.totalorder %s15, 0
      %p61 = por %p59, %p60
      %p62 = scmp.ne.s32.totalorder %s51, %s54
      %p63 = scmp.eq.s32.totalorder %s20, 1
      %p64 = por %p62, %p63
      %p65 = scmp.ne.s32.totalorder %s54, %s55
      %p66 = scmp.eq.s32.totalorder %s20, 0
      %p67 = por %p65, %p66
      %p68 = scmp.ne.s32.totalorder %s54, %s55
      %p69 = scmp.eq.s32.totalorder %s21, 1
      %p70 = por %p68, %p69
      %p72 = scmp.ne.s32.totalorder %s55, %s71
      %p73 = scmp.eq.s32.totalorder %s21, 0
      %p74 = por %p72, %p73
      %p75 = scmp.le.s32.totalorder 1, %s15
      %p76 = scmp.lt.s32.totalorder %s15, 3
      %p77 = pnand %p75, %p76
      %p78 = pneg %p77
      // Predicated region
      $region9: #{tpu_custom_call.1} parent=5 // pred_check
        _
      $region10: #{tpu_custom_call.1} parent=5 // pred_check_branch
        %80 = sbr.rel (%p77) target = $region12
      $region11: #{tpu_custom_call.1} parent=5 // pred_region
        %s81 = ssub.s32 %s15, 1
      $region12: #{tpu_custom_call.1} parent=5 // pred_fallthru
        _
      %p82 = scmp.lt.s32.totalorder %s15, 2
      // Predicated region
      $region13: #{tpu_custom_call.1} parent=5 // pred_check
        %p83 = pneg %p82
      $region14: #{tpu_custom_call.1} parent=5 // pred_check_branch
        %85 = sbr.rel (%p83) target = $region16
      $region15: #{tpu_custom_call.1} parent=5 // pred_region
        // Predicated region
        $region17: #{tpu_custom_call.1} parent=15 // pred_check
          %p86 = pneg %p35
        $region18: #{tpu_custom_call.1} parent=15 // pred_check_branch
          %88 = sbr.rel (%p86) target = $region20
        $region19: #{tpu_custom_call.1} parent=15 // pred_region
          %s89 = sand.u32 %s25, 1
          %s90 = scalar_lea.sflag [#allocation5], %s89
          %s91 = sand.u32 %s25, 1
          %s92 = smul.addr %s91, 8
          %s93 = scalar_lea.vmem [#allocation4], %s92
          %s95 = ssub.s32 128, 128
          %96 = vsyncadd %s90, %s95
          %s97 = smul.addr %s15, 128
          %s98 = scalar_lea.hbm %s1, %s97
          %s100 = sshll.u32 %s93, 4
          %s101 = int_to_ptr.vmem [resolvable:$true] %s100
          %103 = dma.hbm_to_vmem [thread:$0]  %s98, 128, %s101, %s90
        $region20: #{tpu_custom_call.1} parent=15 // pred_fallthru
          _
      $region16: #{tpu_custom_call.1} parent=5 // pred_fallthru
        _
      %p104 = scmp.le.s32.totalorder 1, %s15
      %p105 = scmp.lt.s32.totalorder %s15, 3
      %p106 = pnand %p104, %p105
      %p107 = pneg %p106
      // Predicated region
      $region21: #{tpu_custom_call.1} parent=5 // pred_check
        _
      $region22: #{tpu_custom_call.1} parent=5 // pred_check_branch
        %109 = sbr.rel (%p106) target = $region24
      $region23: #{tpu_custom_call.1} parent=5 // pred_region
        %s110 = ssub.s32 %s15, 1
        %s111 = sand.u32 %s28, 1
        %s112 = scalar_lea.sflag [#allocation5], %s111
        %s113 = sand.u32 %s28, 1
        %s114 = smul.addr %s113, 8
        %s115 = scalar_lea.vmem [#allocation4], %s114
        // Predicated region
        $region25: #{tpu_custom_call.1} parent=23 // pred_check
          %p116 = pneg %p41
        $region26: #{tpu_custom_call.1} parent=23 // pred_check_branch
          %118 = sbr.rel (%p116) target = $region28
        $region27: #{tpu_custom_call.1} parent=23 // pred_region
          %119 = dma.done %s112, 128
        $region28: #{tpu_custom_call.1} parent=23 // pred_fallthru
          _
        %s120 = sand.u32 %s28, 1
        %s121 = scalar_lea.sflag [#allocation5], %s120
        %s122 = sand.u32 %s28, 1
        %s123 = smul.addr %s122, 8
        %s124 = scalar_lea.vmem [#allocation4], %s123
        %p125 = pneg %p41
        %p126 = pneg %p38
        %p127 = pneg %p67
        %p128 = pneg %p64
        %s129 = sand.u32 %s54, 1
        %s130 = scalar_lea.sflag [#allocation6], %s129
        %s131 = sand.u32 %s54, 1
        %s132 = smul.addr %s131, 8
        %s133 = scalar_lea.vmem [#allocation7], %s132
        %v134 = vld [vmem:[%s115] sm:$0xff]
        %s135 = sld [smem:[#allocation3]]
        %v136 = vstv %s135
        %v137 = vmul.f32 %v134, %v136
        %138 = vst [vmem:[%s133] sm:$0xff] %v137
        %s139 = sand.u32 %s54, 1
        %s140 = scalar_lea.sflag [#allocation6], %s139
        %s141 = sand.u32 %s54, 1
        %s142 = smul.addr %s141, 8
        %s143 = scalar_lea.vmem [#allocation7], %s142
        // Predicated region
        $region29: #{tpu_custom_call.1} parent=23 // pred_check
          %p144 = pneg %p64
        $region30: #{tpu_custom_call.1} parent=23 // pred_check_branch
          %146 = sbr.rel (%p144) target = $region32
        $region31: #{tpu_custom_call.1} parent=23 // pred_region
          %s148 = ssub.s32 128, 128
          %149 = vsyncadd %s140, %s148
          %s150 = smul.addr %s20, 128
          %s151 = scalar_lea.hbm %s2, %s150
          %s153 = sshll.u32 %s143, 4
          %s154 = int_to_ptr.vmem [resolvable:$true] %s153
          %156 = dma.vmem_to_hbm [thread:$0]  %s154, 128, %s151, %s140
        $region32: #{tpu_custom_call.1} parent=23 // pred_fallthru
          _
      $region24: #{tpu_custom_call.1} parent=5 // pred_fallthru
        _
      %p157 = scmp.le.s32.totalorder 2, %s15
      // Predicated region
      $region33: #{tpu_custom_call.1} parent=5 // pred_check
        %p158 = pneg %p157
      $region34: #{tpu_custom_call.1} parent=5 // pred_check_branch
        %160 = sbr.rel (%p158) target = $region36
      $region35: #{tpu_custom_call.1} parent=5 // pred_region
        %s161 = ssub.s32 %s15, 2
        // Predicated region
        $region37: #{tpu_custom_call.1} parent=35 // pred_check
          %p162 = pneg %p70
        $region38: #{tpu_custom_call.1} parent=35 // pred_check_branch
          %164 = sbr.rel (%p162) target = $region40
        $region39: #{tpu_custom_call.1} parent=35 // pred_region
          %s165 = sand.u32 %s55, 1
          %s166 = scalar_lea.sflag [#allocation6], %s165
          %s167 = sand.u32 %s55, 1
          %s168 = smul.addr %s167, 8
          %s169 = scalar_lea.vmem [#allocation7], %s168
          %170 = dma.done %s166, 128
        $region40: #{tpu_custom_call.1} parent=35 // pred_fallthru
          _
      $region36: #{tpu_custom_call.1} parent=5 // pred_fallthru
        _
    $region6: #{tpu_custom_call.1} parent=1 // loop_footer
      %s19 = sadd.s32 1, %s15
    $region7: #{tpu_custom_call.1} parent=1 // loop_footer_branch
      %14 = sbr.rel target = $region3
    $region8: #{tpu_custom_call.1} parent=1 // loop_exit
      _
    %171 = vsyncpa [#allocation5], 1
    %s172 = scalar_lea.sflag [#allocation5], 1
    %173 = vsyncpa %s172, 1
    %174 = vsyncpa [#allocation6], 1
    %s175 = scalar_lea.sflag [#allocation6], 1
    %176 = vsyncpa %s175, 1

</llo_original>
